<compile_context>
chip_gen: v7x
topology: tpu7x:2x2x1
jax: 0.10.0
libtpu: 0.0.40
codegen_flags: <defaults>
</compile_context>

<pallas_src>
import functools
import numpy as np
import jax
import jax.numpy as jnp
from jax.experimental import pallas as pl
from jax.experimental.pallas import tpu as pltpu


# -----------------------------------------------------------------------------
# Scalar diffusion-schedule math (numpy) — exact port of the reference code.
# -----------------------------------------------------------------------------
def cosine_log_snr(t, eps=1e-05):
    return -2 * np.log(np.tan(np.pi * t / 2) + eps)


def np_sigmoid(x):
    return 1 / (1 + np.exp(-x))


def cosine_alpha_bar(t):
    return np_sigmoid(cosine_log_snr(t))


def _row_tile(m, cap=512):
    """Row-tile size: full array if small, else a bounded tile that divides M.

    Keeps blocks well below VMEM limits (important on v7x's 64 MiB VMEM) while
    amortizing per-grid-step overhead.
    """
    if m <= cap:
        return m
    return cap if m % cap == 0 else m


# -----------------------------------------------------------------------------
# Pallas kernels
# -----------------------------------------------------------------------------
def _matmul_kernel(a_ref, b_ref, o_ref, *, scale):
    # TODO(synk): at real SD-VAE/UNet sizes, cast operands to bf16 (keep f32
    # accumulation via preferred_element_type) for MXU peak on v6e/v7x.
    acc = jnp.dot(a_ref[...], b_ref[...], preferred_element_type=jnp.float32)
    o_ref[...] = (acc * scale).astype(o_ref.dtype)


def pallas_matmul(a, b, scale=1.0, tm_cap=512):
    """o = (a @ b) * scale ; a: (M, K), b: (K, N). M-tiled, megacore-parallel."""
    M, K = a.shape
    K2, N = b.shape
    assert K == K2
    tm = _row_tile(M, tm_cap)
    grid = (M // tm,)
    return pl.pallas_call(
        functools.partial(_matmul_kernel, scale=float(scale)),
        out_shape=jax.ShapeDtypeStruct((M, N), jnp.float32),
        grid=grid,
        in_specs=[
            pl.BlockSpec((tm, K), lambda i: (i, 0)),
            pl.BlockSpec((K, N), lambda i: (0, 0)),
        ],
        out_specs=pl.BlockSpec((tm, N), lambda i: (i, 0)),
        compiler_params=pltpu.CompilerParams(dimension_semantics=("parallel",)),
    )(a, b)


def _encode_qsample_kernel(p_ref, w_ref, n_ref, z_ref, x0_ref, *,
                           scale, sqrt_ab, sqrt_1m_ab):
    """z = scale * (patches @ W); x0 = sqrt(ab)*z + sqrt(1-ab)*noise (fused)."""
    z = jnp.dot(p_ref[...], w_ref[...], preferred_element_type=jnp.float32) * scale
    z_ref[...] = z.astype(z_ref.dtype)
    x0_ref[...] = (sqrt_ab * z + sqrt_1m_ab * n_ref[...]).astype(x0_ref.dtype)


def pallas_encode_qsample(patches, enc_w, noise, *, scale, sqrt_ab, sqrt_1m_ab,
                          tm_cap=512):
    M, K = patches.shape
    _, N = enc_w.shape
    tm = _row_tile(M, tm_cap)
    grid = (M // tm,)
    return pl.pallas_call(
        functools.partial(_encode_qsample_kernel, scale=float(scale),
                          sqrt_ab=float(sqrt_ab), sqrt_1m_ab=float(sqrt_1m_ab)),
        out_shape=(jax.ShapeDtypeStruct((M, N), jnp.float32),
                   jax.ShapeDtypeStruct((M, N), jnp.float32)),
        grid=grid,
        in_specs=[
            pl.BlockSpec((tm, K), lambda i: (i, 0)),
            pl.BlockSpec((K, N), lambda i: (0, 0)),
            pl.BlockSpec((tm, N), lambda i: (i, 0)),
        ],
        out_specs=(pl.BlockSpec((tm, N), lambda i: (i, 0)),
                   pl.BlockSpec((tm, N), lambda i: (i, 0))),
        compiler_params=pltpu.CompilerParams(dimension_semantics=("parallel",)),
    )(patches, enc_w, noise)


def _fused_euler_kernel(x0_ref, ctx_ref, sel_ref, caemb_ref, tt_ref,
                        w1x_ref, w1c_ref, w2dt_ref, o_ref, *, num_steps):
    """All num_steps explicit-Euler ODE steps in a single kernel.

    v_theta(x, t) = gelu(x @ W1x + ctx @ W1c + ca_emb + time_emb(t)) @ W2
    x <- x + dt * v  (dt is pre-folded into W2dt); x never leaves VMEM/vregs.
    """
    # Step-invariant terms, hoisted out of the time loop:
    #   context projection + per-batch cross-attention embedding (sel is the
    #   batch->row one-hot selector, so sel @ ca_emb broadcasts batch to rows).
    base = (jnp.dot(ctx_ref[...], w1c_ref[...], preferred_element_type=jnp.float32)
            + jnp.dot(sel_ref[...], caemb_ref[...], preferred_element_type=jnp.float32))
    w1x = w1x_ref[...]
    w2dt = w2dt_ref[...]

    def step(k, x):
        t_emb = tt_ref[pl.ds(k, 1), :]              # (1, HIDDEN): broadcasts over rows
        h = jnp.dot(x, w1x, preferred_element_type=jnp.float32) + base + t_emb
        # TODO(synk): PyTorch nn.GELU defaults to exact erf; tanh approx used here.
        h = jax.nn.gelu(h)
        return x + jnp.dot(h, w2dt, preferred_element_type=jnp.float32)

    x = jax.lax.fori_loop(0, num_steps, step, x0_ref[...].astype(jnp.float32),
                          unroll=True)
    o_ref[...] = x.astype(o_ref.dtype)


def pallas_fused_euler(x0, ctx, sel, ca_emb, time_table, w1x, w1c, w2dt,
                       num_steps, tm_cap=512):
    M, C = x0.shape
    B = sel.shape[1]
    H = w1x.shape[1]
    tm = _row_tile(M, tm_cap)
    grid = (M // tm,)
    return pl.pallas_call(
        functools.partial(_fused_euler_kernel, num_steps=int(num_steps)),
        out_shape=jax.ShapeDtypeStruct((M, C), jnp.float32),
        grid=grid,
        in_specs=[
            pl.BlockSpec((tm, C), lambda i: (i, 0)),            # x0
            pl.BlockSpec((tm, C), lambda i: (i, 0)),            # context
            pl.BlockSpec((tm, B), lambda i: (i, 0)),            # batch->row selector
            pl.BlockSpec((B, H), lambda i: (0, 0)),             # ca_emb
            pl.BlockSpec((num_steps, H), lambda i: (0, 0)),     # time table
            pl.BlockSpec((C, H), lambda i: (0, 0)),             # W1 (x half)
            pl.BlockSpec((C, H), lambda i: (0, 0)),             # W1 (ctx half)
            pl.BlockSpec((H, C), lambda i: (0, 0)),             # W2 * dt
        ],
        out_specs=pl.BlockSpec((tm, C), lambda i: (i, 0)),
        compiler_params=pltpu.CompilerParams(dimension_semantics=("parallel",)),
    )(x0, ctx, sel, ca_emb, time_table, w1x, w1c, w2dt)


def _depth_post_kernel(d_ref, o_ref, *, ensemble):
    d = jnp.mean(d_ref[...], axis=1, keepdims=True)        # .mean(dim=1, keepdim=True)
    if ensemble:
        d = jnp.mean(d, axis=0, keepdims=True)              # .mean(dim=0, keepdim=True)
    x = jnp.exp(d)                                           # depth.exp()
    mn = jnp.min(x, axis=(1, 2), keepdims=True)              # per-sample min
    mx = jnp.max(x, axis=(1, 2), keepdims=True)              # per-sample max
    denom = mx - mn
    denom = jnp.where(denom > 0, denom, jnp.ones_like(denom))  # guard min == max
    o_ref[...] = (x - mn) / denom


def pallas_depth_post(dec, ensemble):
    """dec: (B, C, H, W) decoded image -> (B_out, 1, H, W) normalized depth."""
    B, C, H, W = dec.shape
    d3 = dec.reshape(B, C, H * W)
    B_out = 1 if ensemble else B
    out = pl.pallas_call(
        functools.partial(_depth_post_kernel, ensemble=ensemble),
        out_shape=jax.ShapeDtypeStruct((B_out, 1, H * W), jnp.float32),
        grid=(1,),
        in_specs=[pl.BlockSpec((B, C, H * W), lambda i: (0, 0, 0))],
        out_specs=pl.BlockSpec((B_out, 1, H * W), lambda i: (0, 0, 0)),
    )(d3)
    return out.reshape(B_out, 1, H, W)


# -----------------------------------------------------------------------------
# DepthFM (synthetic weights, Pallas hot path)
# -----------------------------------------------------------------------------
class DepthFMPallas:
    """DepthFM forward pass with all hot-path compute in Pallas TPU kernels.

    The pretrained SD-VAE (AutoencoderKL) and LDM UNetModel are replaced by
    deterministic synthetic surrogates with the same dataflow:
      * encode: 8x patchify + linear -> 4 latent channels, * scale_factor
                (q_sample noising fused into the same kernel's epilogue)
      * UNet:   per-pixel gelu-MLP on [x, context] + (time + text) embedding,
                all fixed-step Euler iterations fused into one kernel
      * decode: linear + un-patchify back to (B, 3, H, W)
    The schedule math (cosine alpha_bar), fixed-step Euler ODE, channel /
    ensemble means, exp and per-sample min-max normalization follow the
    reference exactly.
    """

    PATCH = 8          # synthetic VAE downsample factor (SD VAE = 8x)
    LATENT_C = 4       # SD latent channels
    HIDDEN = 32        # UNet surrogate hidden width
    CA_TOKENS = 8      # synthetic empty-text-embedding tokens (real: 77)
    CA_DIM = 32        # synthetic empty-text-embedding dim    (real: 768)

    def __init__(self, seed=0, noising_step=400):
        self.scale_factor = 0.18215
        self.noising_step = noising_step
        p = self.PATCH
        kdim = 3 * p * p
        ks = jax.random.split(jax.random.PRNGKey(seed), 6)
        # TODO(synk): real DepthFM loads a pretrained SD-VAE + LDM UNet checkpoint;
        # these are deterministic synthetic stand-ins of matching shapes/dataflow.
        self.enc_w = jax.random.normal(ks[0], (kdim, self.LATENT_C), jnp.float32) * 0.05
        self.dec_w = jax.random.normal(ks[1], (self.LATENT_C, kdim), jnp.float32) * 0.05
        self.unet_w1 = jax.random.normal(ks[2], (2 * self.LATENT_C, self.HIDDEN), jnp.float32) * 0.2
        self.unet_w2 = jax.random.normal(ks[3], (self.HIDDEN, self.LATENT_C), jnp.float32) * 0.1
        self.ca_w = jax.random.normal(ks[4], (self.CA_DIM, self.HIDDEN), jnp.float32) * 0.1
        self.empty_text_embed = jax.random.normal(
            ks[5], (self.CA_TOKENS, self.CA_DIM), jnp.float32) * 0.1
        # Pre-split W1 into the x-half and context-half once (context term is
        # hoisted out of the Euler time loop inside the fused kernel).
        self.unet_w1_x = self.unet_w1[:self.LATENT_C]
        self.unet_w1_c = self.unet_w1[self.LATENT_C:]

    # ----- VAE surrogate + fused q_sample -----
    def encode(self, x, noise_rng):
        """x: (B,3,H,W) -> (z_flat, x_source_flat, geometry).

        z = scale_factor * (patchify(x) @ enc_w)   [sample_posterior=False surrogate]
        x_source = sqrt(alpha_bar_t) * z + sqrt(1 - alpha_bar_t) * noise
        Both come out of a single pallas_call (q_sample fused into the GEMM epilogue).
        """
        B, C, H, W = x.shape
        p = self.PATCH
        h, w = H // p, W // p
        patches = x.reshape(B, C, h, p, w, p).transpose(0, 2, 4, 1, 3, 5)
        patches = patches.reshape(B * h * w, C * p * p)
        M = B * h * w
        if self.noising_step > 0:
            ab = cosine_alpha_bar(self.noising_step / 1000.0)   # n_diffusion_timesteps=1000
            sqrt_ab, sqrt_1m = float(np.sqrt(ab)), float(np.sqrt(1.0 - ab))
            # Different noise per row => different noise per ensemble member.
            noise = jax.random.normal(noise_rng, (M, self.LATENT_C), jnp.float32)
        else:
            sqrt_ab, sqrt_1m = 1.0, 0.0
            noise = jnp.zeros((M, self.LATENT_C), jnp.float32)
        z, x0 = pallas_encode_qsample(patches, self.enc_w, noise,
                                      scale=self.scale_factor,
                                      sqrt_ab=sqrt_ab, sqrt_1m_ab=sqrt_1m)
        return z, x0, (B, h, w)

    def decode(self, z_flat, geom):
        B, h, w = geom
        p = self.PATCH
        dec = pallas_matmul(z_flat, self.dec_w, scale=1.0 / self.scale_factor)
        dec = dec.reshape(B, h, w, 3, p, p).transpose(0, 3, 1, 4, 2, 5)
        return dec.reshape(B, 3, h * p, w * p)

    # ----- UNet surrogate helpers -----
    def _time_embedding(self, t):
        half = self.HIDDEN // 2
        freqs = np.exp(-np.log(10000.0) * np.arange(half) / half)
        args = t * freqs
        return np.concatenate([np.sin(args), np.cos(args)]).astype(np.float32)

    def generate(self, x_source, geom, context_flat, conditioning, num_steps=8):
        """Fixed-step explicit Euler ODE from t=0 to t=1 (torchdiffeq 'euler'),
        fully fused into a single Pallas kernel."""
        B, h, w = geom
        hw = h * w
        dt = 1.0 / num_steps
        # Cross-attention surrogate: mean-pool tokens, project once (constant over t).
        ca_mean = jnp.mean(conditioning, axis=1)                    # (B, CA_DIM)  glue
        ca_emb = pallas_matmul(ca_mean, self.ca_w)                  # (B, HIDDEN)
        # Small (num_steps, HIDDEN) time-embedding table built once on the host;
        # broadcast to rows inside the kernel (no per-step (M, HIDDEN) arrays).
        time_table = jnp.asarray(
            np.stack([self._time_embedding(k * dt) for k in range(num_steps)], 0),
            jnp.float32)
        # Batch -> row one-hot selector (rows are batch-major contiguous).
        sel = jnp.asarray(np.repeat(np.eye(B, dtype=np.float32), hw, axis=0))
        w2dt = self.unet_w2 * dt                                    # fold Euler dt into W2
        return pallas_fused_euler(x_source, context_flat, sel, ca_emb, time_table,
                                  self.unet_w1_x, self.unet_w1_c, w2dt, num_steps)

    # ----- forward -----
    def forward(self, ims, num_steps=8, ensemble_size=4, noise_rng=None):
        if ensemble_size > 1:
            assert ims.shape[0] == 1, "Ensemble mode only supported with batch size 1"
            ims = jnp.tile(ims, (ensemble_size, 1, 1, 1))
        bs = ims.shape[0]
        if noise_rng is None:
            noise_rng = jax.random.PRNGKey(1)   # deterministic default; pass a key for fresh noise

        ims_z, x_source, geom = self.encode(ims, noise_rng)
        conditioning = jnp.broadcast_to(
            self.empty_text_embed[None], (bs, self.CA_TOKENS, self.CA_DIM))
        context = ims_z

        depth_z = self.generate(x_source, geom, context, conditioning,
                                num_steps=num_steps)
        depth_img = self.decode(depth_z, geom)           # (bs, 3, H, W)
        depth = pallas_depth_post(depth_img, ensemble=ensemble_size > 1)
        return depth                                     # (1 or bs, 1, H, W) in [0, 1]


if __name__ == "__main__":
    key = jax.random.PRNGKey(0)
    B0, C_in, H, W = 1, 3, 32, 32
    ims = jax.random.uniform(key, (B0, C_in, H, W), jnp.float32,
                             minval=-1.0, maxval=1.0)

    model = DepthFMPallas(seed=0, noising_step=400)
    depth = model.forward(ims, num_steps=8, ensemble_size=4)
    depth = jax.block_until_ready(depth)

    assert depth.shape == (1, 1, H, W), depth.shape
    assert bool(jnp.isfinite(depth).all())
    assert float(depth.min()) >= 0.0 and float(depth.max()) <= 1.0 + 1e-6
    print("KERNEL_OK")
</pallas_src>

<mosaic_0001>
module attributes {stable_mosaic.version = 11 : i64} {
  func.func @_encode_qsample_kernel(%arg0: i32, %arg1: memref<64x192xf32, #tpu.memory_space<vmem>>, %arg2: memref<192x4xf32, #tpu.memory_space<vmem>>, %arg3: memref<64x4xf32, #tpu.memory_space<vmem>>, %arg4: memref<64x4xf32, #tpu.memory_space<vmem>>, %arg5: memref<64x4xf32, #tpu.memory_space<vmem>>) attributes {dimension_semantics = [#tpu.dimension_semantics<parallel>], iteration_bounds = array<i64: 1>, scalar_prefetch = 0 : i64, scratch_operands = 0 : i64, tpu.core_type = #tpu.core_type<tc>, window_params = [{transform_indices = @transform_0, window_bounds = array<i64: 64, 192>}, {pipeline_mode = #tpu.pipeline_mode<synchronous>, transform_indices = @transform_1, window_bounds = array<i64: 192, 4>}, {transform_indices = @transform_2, window_bounds = array<i64: 64, 4>}, {transform_indices = @transform_3, window_bounds = array<i64: 64, 4>}, {transform_indices = @transform_4, window_bounds = array<i64: 64, 4>}]} {
    %c0 = arith.constant 0 : index
    %c0_0 = arith.constant 0 : index
    %0 = vector.load %arg1[%c0, %c0_0] : memref<64x192xf32, #tpu.memory_space<vmem>>, vector<64x192xf32>
    %c0_1 = arith.constant 0 : index
    %c0_2 = arith.constant 0 : index
    %1 = vector.load %arg2[%c0_1, %c0_2] : memref<192x4xf32, #tpu.memory_space<vmem>>, vector<192x4xf32>
    %cst = arith.constant dense<0.000000e+00> : vector<64x4xf32>
    %2 = tpu.matmul %0, %1, %cst {dimension_numbers = #tpu.dot_dimension_numbers<[1], [0], [0], [1], [0, 0, 1, 1], [], []>} : vector<64x192xf32>, vector<192x4xf32>, vector<64x4xf32> -> vector<64x4xf32>
    %cst_3 = arith.constant 1.821500e-01 : f32
    %3 = vector.broadcast %cst_3 : f32 to vector<64x4xf32>
    %4 = arith.mulf %2, %3 : vector<64x4xf32>
    %c0_4 = arith.constant 0 : index
    %c0_5 = arith.constant 0 : index
    %5 = vector.load %arg4[%c0_4, %c0_5] : memref<64x4xf32, #tpu.memory_space<vmem>>, vector<64x4xf32>
    tpu.vector_store %arg4[%c0_4, %c0_5], %4 {strides = array<i32>} : memref<64x4xf32, #tpu.memory_space<vmem>>, vector<64x4xf32>,
    %cst_6 = arith.constant 0.809013128 : f32
    %6 = vector.broadcast %cst_6 : f32 to vector<64x4xf32>
    %7 = arith.mulf %6, %4 : vector<64x4xf32>
    %c0_7 = arith.constant 0 : index
    %c0_8 = arith.constant 0 : index
    %8 = vector.load %arg3[%c0_7, %c0_8] : memref<64x4xf32, #tpu.memory_space<vmem>>, vector<64x4xf32>
    %cst_9 = arith.constant 0.587790549 : f32
    %9 = vector.broadcast %cst_9 : f32 to vector<64x4xf32>
    %10 = arith.mulf %9, %8 : vector<64x4xf32>
    %11 = arith.addf %7, %10 : vector<64x4xf32>
    %c0_10 = arith.constant 0 : index
    %c0_11 = arith.constant 0 : index
    %12 = vector.load %arg5[%c0_10, %c0_11] : memref<64x4xf32, #tpu.memory_space<vmem>>, vector<64x4xf32>
    tpu.vector_store %arg5[%c0_10, %c0_11], %11 {strides = array<i32>} : memref<64x4xf32, #tpu.memory_space<vmem>>, vector<64x4xf32>,
    return
  }
  func.func @transform_0(%arg0: i32) -> (i32, i32) {
    %c0_i32 = arith.constant 0 : i32
    %c0_i32_0 = arith.constant 0 : i32
    return %arg0, %c0_i32 : i32, i32
  }
  func.func @transform_1(%arg0: i32) -> (i32, i32) {
    %c0_i32 = arith.constant 0 : i32
    %c0_i32_0 = arith.constant 0 : i32
    %c0_i32_1 = arith.constant 0 : i32
    return %c0_i32, %c0_i32_0 : i32, i32
  }
  func.func @transform_2(%arg0: i32) -> (i32, i32) {
    %c0_i32 = arith.constant 0 : i32
    %c0_i32_0 = arith.constant 0 : i32
    return %arg0, %c0_i32 : i32, i32
  }
  func.func @transform_3(%arg0: i32) -> (i32, i32) {
    %c0_i32 = arith.constant 0 : i32
    %c0_i32_0 = arith.constant 0 : i32
    return %arg0, %c0_i32 : i32, i32
  }
  func.func @transform_4(%arg0: i32) -> (i32, i32) {
    %c0_i32 = arith.constant 0 : i32
    %c0_i32_0 = arith.constant 0 : i32
    return %arg0, %c0_i32 : i32, i32
  }
}

</mosaic_0001>

<llo_original>
// kernel: tpu_custom_call.1
$region0: #{tpu_custom_call.1}
  #allocation0 [shape = 'u32[]', space=smem, size = 0x4, offset = 0x4, fixed_abs, tag = 'smem constant byte address 0x4 - core index']
  #allocation1 [shape = 'u32[144,128]{1,0:T(1,128)}', space=vmem, size = 0x12000, scoped, tag = 'internal scratch']
  %s0 = inlined_call_operand.vmem [shape: f32[64,192], index: 0, kind: input, shape index: {}]
  %s1 = inlined_call_operand.vmem [shape: f32[192,4], index: 1, kind: input, shape index: {}]
  %s2 = inlined_call_operand.vmem [shape: f32[64,4], index: 2, kind: input, shape index: {}]
  %s3 = inlined_call_operand.vmem [shape: f32[64,4], index: 3, kind: output, shape index: {0}]
  %s4 = inlined_call_operand.vmem [shape: f32[64,4], index: 4, kind: output, shape index: {1}]
  %5 = xla_tuple %s3, %s4
  %s6 = sld [smem:[#allocation0]]
  $region30: #{tpu_custom_call.1} parent=0
    _
  %s8 = ssub.s32 1, %s6
  %s9 = scalar_select 0, %s8, %s6
  // Predicated region
  $region2: #{tpu_custom_call.1} parent=0 // pred_check
    _
  $region3: #{tpu_custom_call.1} parent=0 // pred_check_branch
    %11 = sbr.rel (0) target = $region5
  $region4: #{tpu_custom_call.1} parent=0 // pred_region
    _
  $region5: #{tpu_custom_call.1} parent=0 // pred_fallthru
    _
  // Predicated region
  $region6: #{tpu_custom_call.1} parent=0 // pred_check
    _
  $region7: #{tpu_custom_call.1} parent=0 // pred_check_branch
    %13 = sbr.rel (0) target = $region9
  $region8: #{tpu_custom_call.1} parent=0 // pred_region
    _
  $region9: #{tpu_custom_call.1} parent=0 // pred_fallthru
    _
  // Predicated region
  $region10: #{tpu_custom_call.1} parent=0 // pred_check
    _
  $region11: #{tpu_custom_call.1} parent=0 // pred_check_branch
    %15 = sbr.rel (0) target = $region13
  $region12: #{tpu_custom_call.1} parent=0 // pred_region
    _
  $region13: #{tpu_custom_call.1} parent=0 // pred_fallthru
    _
  %v16 = vld [vmem:[%s0] sm:$0xff]
  %v17 = vld [vmem:[%s0 + $0x8] sm:$0xff]
  %v18 = vld [vmem:[%s0 + $0x10] sm:$0xff]
  %v19 = vld [vmem:[%s0 + $0x18] sm:$0xff]
  %v20 = vld [vmem:[%s0 + $0x20] sm:$0xff]
  %v21 = vld [vmem:[%s0 + $0x28] sm:$0xff]
  %v22 = vld [vmem:[%s0 + $0x30] sm:$0xff]
  %v23 = vld [vmem:[%s0 + $0x38] sm:$0xff]
  %v24 = vld [vmem:[%s0 + $0x40] sm:$0xff]
  %v25 = vld [vmem:[%s0 + $0x48] sm:$0xff]
  %v26 = vld [vmem:[%s0 + $0x50] sm:$0xff]
  %v27 = vld [vmem:[%s0 + $0x58] sm:$0xff]
  %v28 = vld [vmem:[%s0 + $0x60] sm:$0xff]
  %v29 = vld [vmem:[%s0 + $0x68] sm:$0xff]
  %v30 = vld [vmem:[%s0 + $0x70] sm:$0xff]
  %v31 = vld [vmem:[%s0 + $0x78] sm:$0xff]
  %v32 = vld [vmem:[%s1] sm:$0xff]
  %v33 = vld [vmem:[%s1 + $0x8] sm:$0xff]
  %v34 = vld [vmem:[%s1 + $0x10] sm:$0xff]
  %v35 = vld [vmem:[%s1 + $0x18] sm:$0xff]
  %v36 = vld [vmem:[%s1 + $0x20] sm:$0xff]
  %v37 = vld [vmem:[%s1 + $0x28] sm:$0xff]
  %v38 = vld [vmem:[%s1 + $0x30] sm:$0xff]
  %v39 = vld [vmem:[%s1 + $0x38] sm:$0xff]
  %v40 = vld [vmem:[%s1 + $0x40] sm:$0xff]
  %v41 = vld [vmem:[%s1 + $0x48] sm:$0xff]
  %v42 = vld [vmem:[%s1 + $0x50] sm:$0xff]
  %v43 = vld [vmem:[%s1 + $0x58] sm:$0xff]
  %v44 = vld [vmem:[%s1 + $0x60] sm:$0xff]
  %v45 = vld [vmem:[%s1 + $0x68] sm:$0xff]
  %v46 = vld [vmem:[%s1 + $0x70] sm:$0xff]
  %v47 = vld [vmem:[%s1 + $0x78] sm:$0xff]
  %v48 = vld [vmem:[%s1 + $0x80] sm:$0xff]
  %v49 = vld [vmem:[%s1 + $0x88] sm:$0xff]
  %v50 = vld [vmem:[%s1 + $0x90] sm:$0xff]
  %v51 = vld [vmem:[%s1 + $0x98] sm:$0xff]
  %v52 = vld [vmem:[%s1 + $0xa0] sm:$0xff]
  %v53 = vld [vmem:[%s1 + $0xa8] sm:$0xff]
  %v54 = vld [vmem:[%s1 + $0xb0] sm:$0xff]
  %v55 = vld [vmem:[%s1 + $0xb8] sm:$0xff]
  %vm56 = vcmask 523264
  %v58 = vsel %vm56, %v17, 0
  %v61 = vsel %vm56, %v19, 0
  %v64 = vsel %vm56, %v21, 0
  %v67 = vsel %vm56, %v23, 0
  %v70 = vsel %vm56, %v25, 0
  %v73 = vsel %vm56, %v27, 0
  %v76 = vsel %vm56, %v29, 0
  %v79 = vsel %vm56, %v31, 0
  %81 = vmatprep.subr.mxu0 0.0
  %82 = vmatpush1.msra.mxu0 %v32
  %83 = vmatprep.subr.mxu0 0.0
  %84 = vmatpush1.msra.mxu0 %v33
  %85 = vmatprep.subr.mxu0 0.0
  %86 = vmatpush1.msra.mxu0 %v34
  %87 = vmatprep.subr.mxu0 0.0
  %88 = vmatpush1.msra.mxu0 %v35
  %89 = vmatprep.subr.mxu0 0.0
  %90 = vmatpush1.msra.mxu0 %v36
  %91 = vmatprep.subr.mxu0 0.0
  %92 = vmatpush1.msra.mxu0 %v37
  %93 = vmatprep.subr.mxu0 0.0
  %94 = vmatpush1.msra.mxu0 %v38
  %95 = vmatprep.subr.mxu0 0.0
  %96 = vmatpush1.msra.mxu0 %v39
  %97 = vmatprep.subr.mxu0 0.0
  %98 = vmatpush1.msra.mxu0 %v40
  %99 = vmatprep.subr.mxu0 0.0
  %100 = vmatpush1.msra.mxu0 %v41
  %101 = vmatprep.subr.mxu0 0.0
  %102 = vmatpush1.msra.mxu0 %v42
  %103 = vmatprep.subr.mxu0 0.0
  %104 = vmatpush1.msra.mxu0 %v43
  %105 = vmatprep.subr.mxu0 0.0
  %106 = vmatpush1.msra.mxu0 %v44
  %107 = vmatprep.subr.mxu0 0.0
  %108 = vmatpush1.msra.mxu0 %v45
  %109 = vmatprep.subr.mxu0 0.0
  %110 = vmatpush1.msra.mxu0 %v46
  %111 = vmatprep.subr.mxu0 0.0
  %112 = vmatpush1.msra.mxu0 %v47
  %113 = vmatprep.subr.mxu0 0.0
  %114 = vmatpush1.msra.mxu0 %v48
  %115 = vmatprep.subr.mxu0 0.0
  %116 = vmatpush1.msra.mxu0 %v49
  %117 = vmatprep.subr.mxu0 0.0
  %118 = vmatpush1.msra.mxu0 %v50
  %119 = vmatprep.subr.mxu0 0.0
  %120 = vmatpush1.msra.mxu0 %v51
  %121 = vmatprep.subr.mxu0 0.0
  %122 = vmatpush1.msra.mxu0 %v52
  %123 = vmatprep.subr.mxu0 0.0
  %124 = vmatpush1.msra.mxu0 %v53
  %125 = vmatprep.subr.mxu0 0.0
  %126 = vmatpush1.msra.mxu0 %v54
  %127 = vmatprep.subr.mxu0 0.0
  %128 = vmatpush1.msra.mxu0 %v55
  %129 = vmatprep.subr.mxu0 0.0
  %130 = vmatpush1.msra.mxu0 0.0
  %131 = vmatprep.subr.mxu0 0.0
  %132 = vmatpush1.msra.mxu0 0.0
  %133 = vmatprep.subr.mxu0 0.0
  %134 = vmatpush1.msra.mxu0 0.0
  %135 = vmatprep.subr.mxu0 0.0
  %136 = vmatpush1.msra.mxu0 0.0
  %137 = vmatprep.subr.mxu0 0.0
  %138 = vmatpush1.msra.mxu0 0.0
  %139 = vmatprep.subr.mxu0 0.0
  %140 = vmatpush1.msra.mxu0 0.0
  %141 = vmatprep.subr.mxu0 0.0
  %142 = vmatpush1.msra.mxu0 0.0
  %143 = vmatprep.subr.mxu0 0.0
  %144 = vmatpush1.msra.mxu0 0.0
  %145 = vmatprep.mubr.f32.mxu0 %v58
  %146 = vmatmul.mubr.f32.gmra.mrb[0].mxu0 %v16
  %v147 = vpop.f32.mrb[0].mxu0
  %v148 = vadd.f32 0.0, %v147
  %v149 = vpop.f32.mrb[0].mxu0
  %150 = vmatprep.mubr.f32.mxu0 %v61
  %151 = vmatmul.mubr.f32.gmra.mrb[0].mxu0 %v18
  %v152 = vpop.f32.mrb[0].mxu0
  %v153 = vadd.f32 0.0, %v152
  %v154 = vpop.f32.mrb[0].mxu0
  %155 = vmatprep.mubr.f32.mxu0 %v64
  %156 = vmatmul.mubr.f32.gmra.mrb[0].mxu0 %v20
  %v157 = vpop.f32.mrb[0].mxu0
  %v158 = vadd.f32 0.0, %v157
  %v159 = vpop.f32.mrb[0].mxu0
  %160 = vmatprep.mubr.f32.mxu0 %v67
  %161 = vmatmul.mubr.f32.gmra.mrb[0].mxu0 %v22
  %v162 = vpop.f32.mrb[0].mxu0
  %v163 = vadd.f32 0.0, %v162
  %v164 = vpop.f32.mrb[0].mxu0
  %165 = vmatprep.mubr.f32.mxu0 %v70
  %166 = vmatmul.mubr.f32.gmra.mrb[0].mxu0 %v24
  %v167 = vpop.f32.mrb[0].mxu0
  %v168 = vadd.f32 0.0, %v167
  %v169 = vpop.f32.mrb[0].mxu0
  %170 = vmatprep.mubr.f32.mxu0 %v73
  %171 = vmatmul.mubr.f32.gmra.mrb[0].mxu0 %v26
  %v172 = vpop.f32.mrb[0].mxu0
  %v173 = vadd.f32 0.0, %v172
  %v174 = vpop.f32.mrb[0].mxu0
  %175 = vmatprep.mubr.f32.mxu0 %v76
  %176 = vmatmul.mubr.f32.gmra.mrb[0].mxu0 %v28
  %v177 = vpop.f32.mrb[0].mxu0
  %v178 = vadd.f32 0.0, %v177
  %v179 = vpop.f32.mrb[0].mxu0
  %180 = vmatprep.mubr.f32.mxu0 %v79
  %181 = vmatmul.mubr.f32.gmra.mrb[0].mxu0 %v30
  %v182 = vpop.f32.mrb[0].mxu0
  %v183 = vadd.f32 0.0, %v182
  %v184 = vpop.f32.mrb[0].mxu0
  %185 = vdwg.mxu0
  %v186 = vmul.f32 %v148, 0.18215
  %v187 = vmul.f32 %v153, 0.18215
  %v188 = vmul.f32 %v158, 0.18215
  %v189 = vmul.f32 %v163, 0.18215
  %v190 = vmul.f32 %v168, 0.18215
  %v191 = vmul.f32 %v173, 0.18215
  %v192 = vmul.f32 %v178, 0.18215
  %v193 = vmul.f32 %v183, 0.18215
  %vm194 = vcmask 31744
  %195 = vst.msk [vmem:[%s3] sm:$0xff] %vm194, %v186
  %196 = vst.msk [vmem:[%s3 + $0x8] sm:$0xff] %vm194, %v187
  %197 = vst.msk [vmem:[%s3 + $0x10] sm:$0xff] %vm194, %v188
  %198 = vst.msk [vmem:[%s3 + $0x18] sm:$0xff] %vm194, %v189
  %199 = vst.msk [vmem:[%s3 + $0x20] sm:$0xff] %vm194, %v190
  %200 = vst.msk [vmem:[%s3 + $0x28] sm:$0xff] %vm194, %v191
  %201 = vst.msk [vmem:[%s3 + $0x30] sm:$0xff] %vm194, %v192
  %202 = vst.msk [vmem:[%s3 + $0x38] sm:$0xff] %vm194, %v193
  %v203 = vmul.f32 %v186, 0.8090131
  %v204 = vmul.f32 %v187, 0.8090131
  %v205 = vmul.f32 %v188, 0.8090131
  %v206 = vmul.f32 %v189, 0.8090131
  %v207 = vmul.f32 %v190, 0.8090131
  %v208 = vmul.f32 %v191, 0.8090131
  %v209 = vmul.f32 %v192, 0.8090131
  %v210 = vmul.f32 %v193, 0.8090131
  %v211 = vld [vmem:[%s2] sm:$0xff]
  %v212 = vld [vmem:[%s2 + $0x8] sm:$0xff]
  %v213 = vld [vmem:[%s2 + $0x10] sm:$0xff]
  %v214 = vld [vmem:[%s2 + $0x18] sm:$0xff]
  %v215 = vld [vmem:[%s2 + $0x20] sm:$0xff]
  %v216 = vld [vmem:[%s2 + $0x28] sm:$0xff]
  %v217 = vld [vmem:[%s2 + $0x30] sm:$0xff]
  %v218 = vld [vmem:[%s2 + $0x38] sm:$0xff]
  %v219 = vmul.f32 %v211, 0.58779055
  %v220 = vmul.f32 %v212, 0.58779055
  %v221 = vmul.f32 %v213, 0.58779055
  %v222 = vmul.f32 %v214, 0.58779055
  %v223 = vmul.f32 %v215, 0.58779055
  %v224 = vmul.f32 %v216, 0.58779055
  %v225 = vmul.f32 %v217, 0.58779055
  %v226 = vmul.f32 %v218, 0.58779055
  %v227 = vadd.f32 %v203, %v219
  %v228 = vadd.f32 %v204, %v220
  %v229 = vadd.f32 %v205, %v221
  %v230 = vadd.f32 %v206, %v222
  %v231 = vadd.f32 %v207, %v223
  %v232 = vadd.f32 %v208, %v224
  %v233 = vadd.f32 %v209, %v225
  %v234 = vadd.f32 %v210, %v226
  %235 = vst.msk [vmem:[%s4] sm:$0xff] %vm194, %v227
  %236 = vst.msk [vmem:[%s4 + $0x8] sm:$0xff] %vm194, %v228
  %237 = vst.msk [vmem:[%s4 + $0x10] sm:$0xff] %vm194, %v229
  %238 = vst.msk [vmem:[%s4 + $0x18] sm:$0xff] %vm194, %v230
  %239 = vst.msk [vmem:[%s4 + $0x20] sm:$0xff] %vm194, %v231
  %240 = vst.msk [vmem:[%s4 + $0x28] sm:$0xff] %vm194, %v232
  %241 = vst.msk [vmem:[%s4 + $0x30] sm:$0xff] %vm194, %v233
  %242 = vst.msk [vmem:[%s4 + $0x38] sm:$0xff] %vm194, %v234
  // Predicated region
  $region14: #{tpu_custom_call.1} parent=0 // pred_check
    _
  $region15: #{tpu_custom_call.1} parent=0 // pred_check_branch
    %244 = sbr.rel (0) target = $region17
  $region16: #{tpu_custom_call.1} parent=0 // pred_region
    _
  $region17: #{tpu_custom_call.1} parent=0 // pred_fallthru
    _
  // Predicated region
  $region18: #{tpu_custom_call.1} parent=0 // pred_check
    _
  $region19: #{tpu_custom_call.1} parent=0 // pred_check_branch
    %246 = sbr.rel (0) target = $region21
  $region20: #{tpu_custom_call.1} parent=0 // pred_region
    _
  $region21: #{tpu_custom_call.1} parent=0 // pred_fallthru
    _
  // Predicated region
  $region22: #{tpu_custom_call.1} parent=0 // pred_check
    _
  $region23: #{tpu_custom_call.1} parent=0 // pred_check_branch
    %248 = sbr.rel (0) target = $region25
  $region24: #{tpu_custom_call.1} parent=0 // pred_region
    _
  $region25: #{tpu_custom_call.1} parent=0 // pred_fallthru
    _
  // Predicated region
  $region26: #{tpu_custom_call.1} parent=0 // pred_check
    _
  $region27: #{tpu_custom_call.1} parent=0 // pred_check_branch
    %250 = sbr.rel (0) target = $region29
  $region28: #{tpu_custom_call.1} parent=0 // pred_region
    _
  $region29: #{tpu_custom_call.1} parent=0 // pred_fallthru
    _

</llo_original>
